<compile_context>
chip_gen: v6e
topology: v6e:2x2x1
jax: 0.10.0
libtpu: 0.0.40
codegen_flags: <defaults>
</compile_context>

<pallas_src>
import functools

import jax
import jax.numpy as jnp
from jax.experimental import pallas as pl
from jax.experimental.pallas import tpu as pltpu


def _cdiv(a, b):
    return -(-a // b)


def _pool_conv_kernel(x_ref, o_ref, buf_ref, *, P, stride, padding,
                      H, W, OH, OW, Wp, HqB, S_used):
    """One (batch, channel-tile) grid step.

    x_ref:   (tc, H, W)             NCHW input tile (W on the lane axis)
    o_ref:   (P*P, tc, OH, OW)      NCHW output tile, window index k = i*P + j
    buf_ref: (S_used, tc, Wp, HqB)  scratch holding the zero-padded image with
                                    the H stride pre-split into phases:
                                    buf[r, c, wp, hq] = x_pad[c, hq*stride + r, wp]
    """
    tc = x_ref.shape[0]
    dtype = x_ref.dtype

    # ---- zero only the padding border of the scratch (interior is fully ----
    # ---- overwritten below, so no full-scratch fill)                     ----
    if padding > 0:
        zw = jnp.zeros((S_used, tc, padding, HqB), dtype)
        buf_ref[:, :, 0:padding, :] = zw                 # left pad columns
        buf_ref[:, :, padding + W:Wp, :] = zw            # right pad columns

    # ---- fill the H-phase-split, zero-padded scratch (once per tile) --------
    for r in range(S_used):
        # padded row = hq*stride + r   <->   input row h = hq*stride + r - padding
        lo = min(HqB, max(0, _cdiv(padding - r, stride)))    # first real row slot
        hi = min(HqB, _cdiv(padding + H - r, stride))        # one past last real
        if padding > 0:
            if lo > 0:      # top padding rows for this phase
                buf_ref[r:r + 1, :, :, 0:lo] = jnp.zeros((1, tc, Wp, lo), dtype)
            if hi < HqB:    # bottom padding rows for this phase
                buf_ref[r:r + 1, :, :, hi:HqB] = jnp.zeros(
                    (1, tc, Wp, HqB - hi), dtype)
        n = hi - lo
        if n <= 0:
            continue
        h0 = lo * stride + r - padding
        if stride == 1:
            rows = x_ref[:, h0:h0 + n, :]                    # (tc, n, W)
        else:
            # strided slice on the sublane (second-minor) axis only
            rows = x_ref[:, pl.ds(h0, n, stride), :]         # (tc, n, W)
        # (tc, n, W) -> (tc, W, n): put W on the sublane axis so the hot loop
        # never needs a lane-strided access (XLU last-two-dim swap).
        buf_ref[r:r + 1, :, padding:padding + W, lo:lo + n] = (
            jnp.swapaxes(rows, -1, -2)[None])

    # ---- P*P window positions: sublane-strided loads, dense NCHW stores -----
    for i in range(P):
        for j in range(P):
            k = i * P + j
            r = i % stride
            base = i // stride
            if stride == 1:
                blk = buf_ref[r:r + 1, :, j:j + OW, base:base + OH]
            else:
                blk = buf_ref[r:r + 1, :, pl.ds(j, OW, stride), base:base + OH]
            # (tc, OW, OH) -> (tc, OH, OW) and store the k-th window's channels.
            o_ref[k:k + 1, :, :, :] = jnp.swapaxes(blk[0], -1, -2)[None]


def _ceil_to(n, m):
    return ((n + m - 1) // m) * m


def _vmem_array_bytes(shape, itemsize):
    """VMEM footprint of an array: minor padded to 128 lanes, 2nd-minor to 8."""
    dims = list(shape)
    dims[-1] = _ceil_to(dims[-1], 128)
    if len(dims) >= 2:
        dims[-2] = _ceil_to(dims[-2], 8)
    n = 1
    for d in dims:
        n *= d
    return n * itemsize


def _vmem_capacity_bytes(default=64 * 1024 * 1024):
    """Per-core VMEM capacity; conservative (v7x-sized) fallback."""
    try:
        info = pltpu.get_tpu_info()
        cap = getattr(info, "vmem_capacity_bytes", None)
        if cap:
            return int(cap)
    except Exception:
        pass
    return default


def _choose_channel_tile(C, batch, footprint, budget):
    """Largest divisor of C whose per-step footprint fits the budget."""
    divisors = sorted((d for d in range(1, C + 1) if C % d == 0), reverse=True)
    fitting = [d for d in divisors if footprint(d) <= budget]
    if not fitting:
        # TODO(synk): OH-row tiling (overlapping input row windows when
        # pooling_size > stride) so huge feature maps fit per-step VMEM.
        raise NotImplementedError(
            "pool_conv: per-step VMEM footprint exceeds the VMEM budget even "
            "with channel_tile=1; OH-row tiling is not implemented.")
    tc = fitting[0]
    # Guarantee >= 2 grid steps when possible so both v7x TensorCores get work
    # (harmless on single-core v5e/v6e: only triggers when B == 1).
    if batch * (C // tc) < 2:
        smaller = [d for d in fitting if d < C]
        if smaller:
            tc = smaller[0]
    return tc


def pool_conv(x, pooling_size, stride=2, padding=0, *, channel_tile=None,
              vmem_limit_bytes=None, interpret=False):
    """Pallas implementation of pool_conv.forward (NCHW in, NCHW out)."""
    B, C, H, W = x.shape
    P = pooling_size
    OH = (H + 2 * padding - P) // stride + 1
    OW = (W + 2 * padding - P) // stride + 1

    S_used = min(stride, P)            # H phases actually referenced
    Wp = W + 2 * padding               # padded width (sublane axis of scratch)
    HqB = OH + (P - 1) // stride       # per-phase row slots (lane axis of scratch)

    itemsize = x.dtype.itemsize

    # Per-chip VMEM budget: ~96 MiB on v5e/v6e (128 MiB physical), ~48 MiB on
    # v7x (64 MiB physical); leave headroom for Mosaic internal scratch.
    cap = _vmem_capacity_bytes()
    if vmem_limit_bytes is None:
        vmem_limit_bytes = min((cap * 3) // 4, 112 * 1024 * 1024)
    budget = max(vmem_limit_bytes - 8 * 1024 * 1024, 4 * 1024 * 1024)

    def footprint(tc):
        return (2 * _vmem_array_bytes((tc, H, W), itemsize)             # in (x2 buf)
                + 2 * _vmem_array_bytes((P * P, tc, OH, OW), itemsize)  # out (x2 buf)
                + _vmem_array_bytes((S_used, tc, Wp, HqB), itemsize))   # scratch

    tc = (channel_tile if channel_tile is not None
          else _choose_channel_tile(C, B, footprint, budget))
    assert C % tc == 0, (C, tc)

    kernel = functools.partial(
        _pool_conv_kernel, P=P, stride=stride, padding=padding,
        H=H, W=W, OH=OH, OW=OW, Wp=Wp, HqB=HqB, S_used=S_used)

    out5 = pl.pallas_call(
        kernel,
        out_shape=jax.ShapeDtypeStruct((B, P * P, C, OH, OW), x.dtype),
        grid=(B, C // tc),
        in_specs=[pl.BlockSpec((None, tc, H, W), lambda b, c: (b, c, 0, 0))],
        out_specs=pl.BlockSpec((None, P * P, tc, OH, OW),
                               lambda b, c: (b, 0, c, 0, 0)),
        scratch_shapes=[pltpu.VMEM((S_used, tc, Wp, HqB), x.dtype)],
        compiler_params=pltpu.CompilerParams(
            dimension_semantics=("parallel", "parallel"),
            vmem_limit_bytes=int(vmem_limit_bytes)),
        cost_estimate=pl.CostEstimate(
            flops=0, transcendentals=0,
            bytes_accessed=itemsize * B * C * (H * W + P * P * OH * OW)),
        interpret=interpret,
    )(x)

    # (B, P*P, C, OH, OW) -> (B, P*P*C, OH, OW): pure dim merge, no data
    # movement; channel order (i*P + j)*C + c matches
    # torch.cat([F.conv2d(...) for (i, j) ...], dim=1).
    return out5.reshape(B, P * P * C, OH, OW)


def pool_conv_ref(x, pooling_size, stride=2, padding=0):
    """Pure-JAX reference (equivalent to the PyTorch grouped one-hot convs)."""
    B, C, H, W = x.shape
    P = pooling_size
    OH = (H + 2 * padding - P) // stride + 1
    OW = (W + 2 * padding - P) // stride + 1
    xp = jnp.pad(x, ((0, 0), (0, 0), (padding, padding), (padding, padding)))
    outs = []
    for i in range(P):
        for j in range(P):
            outs.append(
                xp[:, :,
                   i: i + stride * (OH - 1) + 1: stride,
                   j: j + stride * (OW - 1) + 1: stride])
    return jnp.concatenate(outs, axis=1)


if __name__ == "__main__":
    key = jax.random.PRNGKey(0)
    B, C, H, W = 2, 4, 16, 16
    x = jax.random.normal(key, (B, C, H, W), dtype=jnp.float32)

    # Case 1: module defaults (pooling_size=2, stride=2, padding=0)
    out1 = pool_conv(x, pooling_size=2, stride=2, padding=0)
    jax.block_until_ready(out1)
    ref1 = pool_conv_ref(x, pooling_size=2, stride=2, padding=0)
    assert out1.shape == (B, 2 * 2 * C, 8, 8), out1.shape
    assert jnp.array_equal(out1, ref1), "mismatch vs reference (P=2, s=2, p=0)"

    # Case 2: exercise padding (pooling_size=3, stride=2, padding=1)
    out2 = pool_conv(x, pooling_size=3, stride=2, padding=1)
    jax.block_until_ready(out2)
    ref2 = pool_conv_ref(x, pooling_size=3, stride=2, padding=1)
    assert out2.shape == (B, 3 * 3 * C, 8, 8), out2.shape
    assert jnp.array_equal(out2, ref2), "mismatch vs reference (P=3, s=2, p=1)"

    # Case 3: stride 1 (pooling_size=2, stride=1, padding=0)
    out3 = pool_conv(x, pooling_size=2, stride=1, padding=0)
    jax.block_until_ready(out3)
    ref3 = pool_conv_ref(x, pooling_size=2, stride=1, padding=0)
    assert out3.shape == (B, 2 * 2 * C, 15, 15), out3.shape
    assert jnp.array_equal(out3, ref3), "mismatch vs reference (P=2, s=1, p=0)"

    print("KERNEL_OK")
</pallas_src>

<mosaic_0001>
module attributes {stable_mosaic.version = 11 : i64} {
  func.func @_pool_conv_kernel(%arg0: i32, %arg1: i32, %arg2: memref<1x4x16x16xf32, #tpu.memory_space<vmem>>, %arg3: memref<1x4x4x8x8xf32, #tpu.memory_space<vmem>>, %arg4: memref<2x4x16x8xf32, #tpu.memory_space<vmem>>) attributes {dimension_semantics = [#tpu.dimension_semantics<parallel>, #tpu.dimension_semantics<parallel>], iteration_bounds = array<i64: 2, 1>, scalar_prefetch = 0 : i64, scratch_operands = 1 : i64, tpu.core_type = #tpu.core_type<tc>, window_params = [{transform_indices = @transform_0, window_bounds = array<i64: 1, 4, 16, 16>}, {transform_indices = @transform_1, window_bounds = array<i64: 1, 4, 4, 8, 8>}]} {
    %c0 = arith.constant 0 : index
    %c0_0 = arith.constant 0 : index
    %c0_1 = arith.constant 0 : index
    %c0_2 = arith.constant 0 : index
    %0 = tpu.strided_load %arg2[%c0, %c0_0, %c0_1, %c0_2] {strides = array<i32: 1, 1, 2, 1>} : memref<1x4x16x16xf32, #tpu.memory_space<vmem>>, vector<1x4x8x16xf32>
    %1 = vector.shape_cast %0 : vector<1x4x8x16xf32> to vector<4x8x16xf32>
    %2 = tpu.transpose %1, [0, 2, 1] : vector<4x8x16xf32> -> vector<4x16x8xf32>
    %3 = vector.shape_cast %2 : vector<4x16x8xf32> to vector<1x4x16x8xf32>
    %c0_3 = arith.constant 0 : index
    %c0_4 = arith.constant 0 : index
    %c0_5 = arith.constant 0 : index
    %c0_6 = arith.constant 0 : index
    %4 = vector.load %arg4[%c0_3, %c0_4, %c0_5, %c0_6] : memref<2x4x16x8xf32, #tpu.memory_space<vmem>>, vector<1x4x16x8xf32>
    tpu.vector_store %arg4[%c0_3, %c0_4, %c0_5, %c0_6], %3 {strides = array<i32>} : memref<2x4x16x8xf32, #tpu.memory_space<vmem>>, vector<1x4x16x8xf32>,
    %c0_7 = arith.constant 0 : index
    %c0_8 = arith.constant 0 : index
    %c1 = arith.constant 1 : index
    %c0_9 = arith.constant 0 : index
    %5 = tpu.strided_load %arg2[%c0_7, %c0_8, %c1, %c0_9] {strides = array<i32: 1, 1, 2, 1>} : memref<1x4x16x16xf32, #tpu.memory_space<vmem>>, vector<1x4x8x16xf32>
    %6 = vector.shape_cast %5 : vector<1x4x8x16xf32> to vector<4x8x16xf32>
    %7 = tpu.transpose %6, [0, 2, 1] : vector<4x8x16xf32> -> vector<4x16x8xf32>
    %8 = vector.shape_cast %7 : vector<4x16x8xf32> to vector<1x4x16x8xf32>
    %c1_10 = arith.constant 1 : index
    %c0_11 = arith.constant 0 : index
    %c0_12 = arith.constant 0 : index
    %c0_13 = arith.constant 0 : index
    %9 = vector.load %arg4[%c1_10, %c0_11, %c0_12, %c0_13] : memref<2x4x16x8xf32, #tpu.memory_space<vmem>>, vector<1x4x16x8xf32>
    tpu.vector_store %arg4[%c1_10, %c0_11, %c0_12, %c0_13], %8 {strides = array<i32>} : memref<2x4x16x8xf32, #tpu.memory_space<vmem>>, vector<1x4x16x8xf32>,
    %c0_14 = arith.constant 0 : index
    %c0_15 = arith.constant 0 : index
    %c0_16 = arith.constant 0 : index
    %c0_17 = arith.constant 0 : index
    %10 = tpu.strided_load %arg4[%c0_14, %c0_15, %c0_16, %c0_17] {strides = array<i32: 1, 1, 2, 1>} : memref<2x4x16x8xf32, #tpu.memory_space<vmem>>, vector<1x4x8x8xf32>
    %11 = vector.shape_cast %10 : vector<1x4x8x8xf32> to vector<4x8x8xf32>
    %12 = tpu.transpose %11, [0, 2, 1] : vector<4x8x8xf32> -> vector<4x8x8xf32>
    %13 = vector.shape_cast %12 : vector<4x8x8xf32> to vector<1x4x8x8xf32>
    %c0_18 = arith.constant 0 : index
    %c0_19 = arith.constant 0 : index
    %c0_20 = arith.constant 0 : index
    %c0_21 = arith.constant 0 : index
    %c0_22 = arith.constant 0 : index
    %14 = vector.load %arg3[%c0_18, %c0_19, %c0_20, %c0_21, %c0_22] : memref<1x4x4x8x8xf32, #tpu.memory_space<vmem>>, vector<1x1x4x8x8xf32>
    %15 = vector.shape_cast %14 : vector<1x1x4x8x8xf32> to vector<1x4x8x8xf32>
    %16 = vector.shape_cast %13 : vector<1x4x8x8xf32> to vector<1x1x4x8x8xf32>
    tpu.vector_store %arg3[%c0_18, %c0_19, %c0_20, %c0_21, %c0_22], %16 {strides = array<i32>} : memref<1x4x4x8x8xf32, #tpu.memory_space<vmem>>, vector<1x1x4x8x8xf32>,
    %c0_23 = arith.constant 0 : index
    %c0_24 = arith.constant 0 : index
    %c1_25 = arith.constant 1 : index
    %c0_26 = arith.constant 0 : index
    %17 = tpu.strided_load %arg4[%c0_23, %c0_24, %c1_25, %c0_26] {strides = array<i32: 1, 1, 2, 1>} : memref<2x4x16x8xf32, #tpu.memory_space<vmem>>, vector<1x4x8x8xf32>
    %18 = vector.shape_cast %17 : vector<1x4x8x8xf32> to vector<4x8x8xf32>
    %19 = tpu.transpose %18, [0, 2, 1] : vector<4x8x8xf32> -> vector<4x8x8xf32>
    %20 = vector.shape_cast %19 : vector<4x8x8xf32> to vector<1x4x8x8xf32>
    %c0_27 = arith.constant 0 : index
    %c1_28 = arith.constant 1 : index
    %c0_29 = arith.constant 0 : index
    %c0_30 = arith.constant 0 : index
    %c0_31 = arith.constant 0 : index
    %21 = vector.load %arg3[%c0_27, %c1_28, %c0_29, %c0_30, %c0_31] : memref<1x4x4x8x8xf32, #tpu.memory_space<vmem>>, vector<1x1x4x8x8xf32>
    %22 = vector.shape_cast %21 : vector<1x1x4x8x8xf32> to vector<1x4x8x8xf32>
    %23 = vector.shape_cast %20 : vector<1x4x8x8xf32> to vector<1x1x4x8x8xf32>
    tpu.vector_store %arg3[%c0_27, %c1_28, %c0_29, %c0_30, %c0_31], %23 {strides = array<i32>} : memref<1x4x4x8x8xf32, #tpu.memory_space<vmem>>, vector<1x1x4x8x8xf32>,
    %c1_32 = arith.constant 1 : index
    %c0_33 = arith.constant 0 : index
    %c0_34 = arith.constant 0 : index
    %c0_35 = arith.constant 0 : index
    %24 = tpu.strided_load %arg4[%c1_32, %c0_33, %c0_34, %c0_35] {strides = array<i32: 1, 1, 2, 1>} : memref<2x4x16x8xf32, #tpu.memory_space<vmem>>, vector<1x4x8x8xf32>
    %25 = vector.shape_cast %24 : vector<1x4x8x8xf32> to vector<4x8x8xf32>
    %26 = tpu.transpose %25, [0, 2, 1] : vector<4x8x8xf32> -> vector<4x8x8xf32>
    %27 = vector.shape_cast %26 : vector<4x8x8xf32> to vector<1x4x8x8xf32>
    %c0_36 = arith.constant 0 : index
    %c2 = arith.constant 2 : index
    %c0_37 = arith.constant 0 : index
    %c0_38 = arith.constant 0 : index
    %c0_39 = arith.constant 0 : index
    %28 = vector.load %arg3[%c0_36, %c2, %c0_37, %c0_38, %c0_39] : memref<1x4x4x8x8xf32, #tpu.memory_space<vmem>>, vector<1x1x4x8x8xf32>
    %29 = vector.shape_cast %28 : vector<1x1x4x8x8xf32> to vector<1x4x8x8xf32>
    %30 = vector.shape_cast %27 : vector<1x4x8x8xf32> to vector<1x1x4x8x8xf32>
    tpu.vector_store %arg3[%c0_36, %c2, %c0_37, %c0_38, %c0_39], %30 {strides = array<i32>} : memref<1x4x4x8x8xf32, #tpu.memory_space<vmem>>, vector<1x1x4x8x8xf32>,
    %c1_40 = arith.constant 1 : index
    %c0_41 = arith.constant 0 : index
    %c1_42 = arith.constant 1 : index
    %c0_43 = arith.constant 0 : index
    %31 = tpu.strided_load %arg4[%c1_40, %c0_41, %c1_42, %c0_43] {strides = array<i32: 1, 1, 2, 1>} : memref<2x4x16x8xf32, #tpu.memory_space<vmem>>, vector<1x4x8x8xf32>
    %32 = vector.shape_cast %31 : vector<1x4x8x8xf32> to vector<4x8x8xf32>
    %33 = tpu.transpose %32, [0, 2, 1] : vector<4x8x8xf32> -> vector<4x8x8xf32>
    %34 = vector.shape_cast %33 : vector<4x8x8xf32> to vector<1x4x8x8xf32>
    %c0_44 = arith.constant 0 : index
    %c3 = arith.constant 3 : index
    %c0_45 = arith.constant 0 : index
    %c0_46 = arith.constant 0 : index
    %c0_47 = arith.constant 0 : index
    %35 = vector.load %arg3[%c0_44, %c3, %c0_45, %c0_46, %c0_47] : memref<1x4x4x8x8xf32, #tpu.memory_space<vmem>>, vector<1x1x4x8x8xf32>
    %36 = vector.shape_cast %35 : vector<1x1x4x8x8xf32> to vector<1x4x8x8xf32>
    %37 = vector.shape_cast %34 : vector<1x4x8x8xf32> to vector<1x1x4x8x8xf32>
    tpu.vector_store %arg3[%c0_44, %c3, %c0_45, %c0_46, %c0_47], %37 {strides = array<i32>} : memref<1x4x4x8x8xf32, #tpu.memory_space<vmem>>, vector<1x1x4x8x8xf32>,
    return
  }
  func.func @transform_0(%arg0: i32, %arg1: i32) -> (i32, i32, i32, i32) {
    %c0_i32 = arith.constant 0 : i32
    %c0_i32_0 = arith.constant 0 : i32
    %c0_i32_1 = arith.constant 0 : i32
    return %arg0, %arg1, %c0_i32, %c0_i32_0 : i32, i32, i32, i32
  }
  func.func @transform_1(%arg0: i32, %arg1: i32) -> (i32, i32, i32, i32, i32) {
    %c0_i32 = arith.constant 0 : i32
    %c0_i32_0 = arith.constant 0 : i32
    %c0_i32_1 = arith.constant 0 : i32
    %c0_i32_2 = arith.constant 0 : i32
    return %arg0, %c0_i32, %arg1, %c0_i32_0, %c0_i32_1 : i32, i32, i32, i32, i32
  }
}

</mosaic_0001>

<llo_original>
// kernel: tpu_custom_call.1
$region0: #{tpu_custom_call.1}
  #allocation0 [shape = 'u32[]', space=smem, size = 0x4, offset = 0x4, fixed_abs, tag = 'smem constant byte address 0x4 - core index']
  #allocation1 [shape = 'u32[144,128]{1,0:T(1,128)}', space=vmem, size = 0x12000, scoped, tag = 'internal scratch']
  #allocation2 [shape = 'f32[2,4,16,8]{3,2,1,0:T(8,128)}', space=vmem, size = 0x10000, scoped, tag = 'scratch operand']
  %s0 = inlined_call_operand.hbm [shape: f32[2,4,16,16], index: 0, kind: input, shape index: {}]
  %s1 = inlined_call_operand.hbm [shape: f32[2,4,4,8,8], index: 1, kind: output, shape index: {}]
  %s2 = sld [smem:[#allocation0]]
  $region41: #{tpu_custom_call.1} parent=0
    _
  %s4 = ssub.s32 1, %s2
  %s5 = scalar_select 0, %s4, %s2
  $region1: #{tpu_custom_call.1} parent=0
    #allocation3 [shape = 'u8[65536]{0}', space=vmem, size = 0x10000, scoped, tag = 'input window, operand 0']
    #allocation4 [shape = 's32[2]{0}', space=sflag, size = 0x8, scoped, tag = 'scoped memory for tpu_custom_call.1']
    #allocation5 [shape = 's32[2]{0}', space=sflag, size = 0x8, scoped, tag = 'scoped memory for tpu_custom_call.1']
    #allocation6 [shape = 'u8[131072]{0}', space=vmem, size = 0x20000, scoped, tag = 'output window, operand 0']
    %6 = vsyncpa [#allocation4], 0
    %s7 = scalar_lea.sflag [#allocation4], 1
    %8 = vsyncpa %s7, 0
    %9 = vsyncpa [#allocation5], 0
    %s10 = scalar_lea.sflag [#allocation5], 1
    %11 = vsyncpa %s10, 0
    loop: start=0, step=1, limit=4
    $region2: #{tpu_custom_call.1} parent=1 // loop_pre_header
      _
    $region3: #{tpu_custom_call.1} parent=1 // loop_header
      %s13 = sphi 0, %s17
      %p14 = scmp.ge.s32.totalorder %s13, 4
      %s20 = sphi 0, %s32
      %s21 = sphi 0, %s28
      %s22 = sphi 0, %s20
      %s23 = sphi 0, %s21
      %s24 = sphi 0, %s22
      %s25 = sphi 0, %s23
      %s37 = sphi 0, %s39
      %s40 = sphi 0, %s37
      %s41 = sphi 0, %s40
      %s57 = sphi 0, %s41
      %s65 = sphi 0, %s67
      %s68 = sphi 0, %s65
      %s69 = sphi 0, %s68
      %s85 = sphi 0, %s69
    $region4: #{tpu_custom_call.1} parent=1 // loop_header_branch
      %16 = sbr.rel (%p14) target = $region8
    $region5: #{tpu_custom_call.1} parent=1 // loop_body
      %s18 = ssub.s32 %s13, 1
      %s19 = ssub.s32 %s13, 2
      %s26 = sadd.s32 1, %s21
      %p27 = scmp.ge.s32.totalorder %s26, 1
      %s28 = scalar_select %p27, 0, %s26
      %s29 = sadd.s32 1, %s20
      %s30 = scalar_select %p27, %s29, %s20
      %p31 = scmp.ge.s32.totalorder %s30, 2
      %s32 = scalar_select %p31, 0, %s30
      %s33 = ssub.s32 %s20, %s32
      %s34 = ssub.s32 %s21, %s28
      %s35 = sor.u32 %s33, %s34
      %p36 = scmp.eq.s32.totalorder %s35, 0
      %s38 = sadd.s32 %s37, 1
      %s39 = scalar_select %p36, %s37, %s38
      %p42 = pneg %p36
      %p43 = scmp.eq.s32.totalorder %s13, 1
      %p44 = por %p42, %p43
      %p45 = scmp.ne.s32.totalorder %s37, %s40
      %p46 = scmp.eq.s32.totalorder %s13, 0
      %p47 = por %p45, %p46
      %p48 = scmp.ne.s32.totalorder %s37, %s40
      %p49 = scmp.eq.s32.totalorder %s18, 1
      %p50 = por %p48, %p49
      %p51 = scmp.ne.s32.totalorder %s40, %s41
      %p52 = scmp.eq.s32.totalorder %s18, 0
      %p53 = por %p51, %p52
      %p54 = scmp.ne.s32.totalorder %s40, %s41
      %p55 = scmp.eq.s32.totalorder %s19, 1
      %p56 = por %p54, %p55
      %p58 = scmp.ne.s32.totalorder %s41, %s57
      %p59 = scmp.eq.s32.totalorder %s19, 0
      %p60 = por %p58, %p59
      %s61 = ssub.s32 %s20, %s32
      %s62 = ssub.s32 %s21, %s28
      %s63 = sor.u32 %s61, %s62
      %p64 = scmp.eq.s32.totalorder %s63, 0
      %s66 = sadd.s32 %s65, 1
      %s67 = scalar_select %p64, %s65, %s66
      %p70 = pneg %p64
      %p71 = scmp.eq.s32.totalorder %s13, 1
      %p72 = por %p70, %p71
      %p73 = scmp.ne.s32.totalorder %s65, %s68
      %p74 = scmp.eq.s32.totalorder %s13, 0
      %p75 = por %p73, %p74
      %p76 = scmp.ne.s32.totalorder %s65, %s68
      %p77 = scmp.eq.s32.totalorder %s18, 1
      %p78 = por %p76, %p77
      %p79 = scmp.ne.s32.totalorder %s68, %s69
      %p80 = scmp.eq.s32.totalorder %s18, 0
      %p81 = por %p79, %p80
      %p82 = scmp.ne.s32.totalorder %s68, %s69
      %p83 = scmp.eq.s32.totalorder %s19, 1
      %p84 = por %p82, %p83
      %p86 = scmp.ne.s32.totalorder %s69, %s85
      %p87 = scmp.eq.s32.totalorder %s19, 0
      %p88 = por %p86, %p87
      %p89 = scmp.le.s32.totalorder 1, %s13
      %p90 = scmp.lt.s32.totalorder %s13, 3
      %p91 = pnand %p89, %p90
      %p92 = pneg %p91
      // Predicated region
      $region9: #{tpu_custom_call.1} parent=5 // pred_check
        _
      $region10: #{tpu_custom_call.1} parent=5 // pred_check_branch
        %94 = sbr.rel (%p91) target = $region12
      $region11: #{tpu_custom_call.1} parent=5 // pred_region
        %s95 = ssub.s32 %s13, 1
      $region12: #{tpu_custom_call.1} parent=5 // pred_fallthru
        _
      %p96 = scmp.lt.s32.totalorder %s13, 2
      // Predicated region
      $region13: #{tpu_custom_call.1} parent=5 // pred_check
        %p97 = pneg %p96
      $region14: #{tpu_custom_call.1} parent=5 // pred_check_branch
        %99 = sbr.rel (%p97) target = $region16
      $region15: #{tpu_custom_call.1} parent=5 // pred_region
        // Predicated region
        $region17: #{tpu_custom_call.1} parent=15 // pred_check
          %p100 = pneg %p47
        $region18: #{tpu_custom_call.1} parent=15 // pred_check_branch
          %102 = sbr.rel (%p100) target = $region20
        $region19: #{tpu_custom_call.1} parent=15 // pred_region
          %s103 = sand.u32 %s37, 1
          %s104 = scalar_lea.sflag [#allocation4], %s103
          %s105 = sand.u32 %s37, 1
          %s106 = smul.addr %s105, 64
          %s107 = scalar_lea.vmem [#allocation3], %s106
          %s108 = smul.u32 4, %s21
          %s110 = ssub.s32 1024, 1024
          %111 = vsyncadd %s104, %s110
          %s112 = smul.addr %s108, 2
          %s113 = smul.addr %s20, 8
          %s114 = sadd.s32 %s112, %s113
          %s115 = smul.addr %s114, 128
          %s116 = scalar_lea.hbm %s0, %s115
          %s117 = sshll.u32 %s107, 4
          %s118 = int_to_ptr.vmem [resolvable:$true] %s117
          %123 = dma.hbm_to_vmem [thread:$0]  %s116, 1024, %s118, %s104, 128, 128, 8
        $region20: #{tpu_custom_call.1} parent=15 // pred_fallthru
          _
      $region16: #{tpu_custom_call.1} parent=5 // pred_fallthru
        _
      %p124 = scmp.le.s32.totalorder 1, %s13
      %p125 = scmp.lt.s32.totalorder %s13, 3
      %p126 = pnand %p124, %p125
      %p127 = pneg %p126
      // Predicated region
      $region21: #{tpu_custom_call.1} parent=5 // pred_check
        _
      $region22: #{tpu_custom_call.1} parent=5 // pred_check_branch
        %129 = sbr.rel (%p126) target = $region24
      $region23: #{tpu_custom_call.1} parent=5 // pred_region
        %s130 = ssub.s32 %s13, 1
        %s131 = sand.u32 %s40, 1
        %s132 = scalar_lea.sflag [#allocation4], %s131
        %s133 = sand.u32 %s40, 1
        %s134 = smul.addr %s133, 64
        %s135 = scalar_lea.vmem [#allocation3], %s134
        // Predicated region
        $region25: #{tpu_custom_call.1} parent=23 // pred_check
          %p136 = pneg %p53
        $region26: #{tpu_custom_call.1} parent=23 // pred_check_branch
          %138 = sbr.rel (%p136) target = $region28
        $region27: #{tpu_custom_call.1} parent=23 // pred_region
          %139 = dma.done %s132, 1024
        $region28: #{tpu_custom_call.1} parent=23 // pred_fallthru
          _
        %s140 = sand.u32 %s40, 1
        %s141 = scalar_lea.sflag [#allocation4], %s140
        %s142 = sand.u32 %s40, 1
        %s143 = smul.addr %s142, 64
        %s144 = scalar_lea.vmem [#allocation3], %s143
        %p145 = pneg %p53
        %p146 = pneg %p50
        %p147 = pneg %p81
        %p148 = pneg %p78
        %s149 = sand.u32 %s68, 1
        %s150 = scalar_lea.sflag [#allocation5], %s149
        %s151 = sand.u32 %s68, 1
        %s152 = smul.addr %s151, 128
        %s153 = scalar_lea.vmem [#allocation6], %s152
        %s154 = smul.u32 4, %s23
        %s155 = smul.u32 4, %s23
        %v156 = vld [vmem:[%s135] ss:$2 sm:$0xff]
        %s157 = scalar_lea.vmem %s135, 16 [#allocation3]
        %v158 = vld [vmem:[%s157] ss:$2 sm:$0xff]
        %s159 = scalar_lea.vmem %s135, 32 [#allocation3]
        %v160 = vld [vmem:[%s159] ss:$2 sm:$0xff]
        %s161 = scalar_lea.vmem %s135, 48 [#allocation3]
        %v162 = vld [vmem:[%s161] ss:$2 sm:$0xff]
        %163 = vxpose.xlu0.b32.start [1/16] %v156, 128
        %164 = vxpose.xlu0.b32.cont [2/16] 0.0, 128
        %165 = vxpose.xlu0.b32.cont [3/16] 0.0, 128
        %166 = vxpose.xlu0.b32.cont [4/16] 0.0, 128
        %167 = vxpose.xlu0.b32.cont [5/16] 0.0, 128
        %168 = vxpose.xlu0.b32.cont [6/16] 0.0, 128
        %169 = vxpose.xlu0.b32.cont [7/16] 0.0, 128
        %170 = vxpose.xlu0.b32.cont [8/16] 0.0, 128
        %171 = vxpose.xlu0.b32.cont [9/16] 0.0, 128
        %172 = vxpose.xlu0.b32.cont [10/16] 0.0, 128
        %173 = vxpose.xlu0.b32.cont [11/16] 0.0, 128
        %174 = vxpose.xlu0.b32.cont [12/16] 0.0, 128
        %175 = vxpose.xlu0.b32.cont [13/16] 0.0, 128
        %176 = vxpose.xlu0.b32.cont [14/16] 0.0, 128
        %177 = vxpose.xlu0.b32.cont [15/16] 0.0, 128
        %178 = vxpose.xlu0.b32.end [16/16] 0.0, 128
        %v179 = vpop.trf.xlu0
        %v180 = vpop.trf.xlu0
        %v181 = vpop.trf.xlu0
        %v182 = vpop.trf.xlu0
        %v183 = vpop.trf.xlu0
        %v184 = vpop.trf.xlu0
        %v185 = vpop.trf.xlu0
        %v186 = vpop.trf.xlu0
        %v187 = vpop.trf.xlu0
        %v188 = vpop.trf.xlu0
        %v189 = vpop.trf.xlu0
        %v190 = vpop.trf.xlu0
        %v191 = vpop.trf.xlu0
        %v192 = vpop.trf.xlu0
        %v193 = vpop.trf.xlu0
        %v194 = vpop.trf.xlu0
        %195 = vxpose.xlu0.b32.start [1/16] %v158, 128
        %196 = vxpose.xlu0.b32.cont [2/16] 0.0, 128
        %197 = vxpose.xlu0.b32.cont [3/16] 0.0, 128
        %198 = vxpose.xlu0.b32.cont [4/16] 0.0, 128
        %199 = vxpose.xlu0.b32.cont [5/16] 0.0, 128
        %200 = vxpose.xlu0.b32.cont [6/16] 0.0, 128
        %201 = vxpose.xlu0.b32.cont [7/16] 0.0, 128
        %202 = vxpose.xlu0.b32.cont [8/16] 0.0, 128
        %203 = vxpose.xlu0.b32.cont [9/16] 0.0, 128
        %204 = vxpose.xlu0.b32.cont [10/16] 0.0, 128
        %205 = vxpose.xlu0.b32.cont [11/16] 0.0, 128
        %206 = vxpose.xlu0.b32.cont [12/16] 0.0, 128
        %207 = vxpose.xlu0.b32.cont [13/16] 0.0, 128
        %208 = vxpose.xlu0.b32.cont [14/16] 0.0, 128
        %209 = vxpose.xlu0.b32.cont [15/16] 0.0, 128
        %210 = vxpose.xlu0.b32.end [16/16] 0.0, 128
        %v211 = vpop.trf.xlu0
        %v212 = vpop.trf.xlu0
        %v213 = vpop.trf.xlu0
        %v214 = vpop.trf.xlu0
        %v215 = vpop.trf.xlu0
        %v216 = vpop.trf.xlu0
        %v217 = vpop.trf.xlu0
        %v218 = vpop.trf.xlu0
        %v219 = vpop.trf.xlu0
        %v220 = vpop.trf.xlu0
        %v221 = vpop.trf.xlu0
        %v222 = vpop.trf.xlu0
        %v223 = vpop.trf.xlu0
        %v224 = vpop.trf.xlu0
        %v225 = vpop.trf.xlu0
        %v226 = vpop.trf.xlu0
        %227 = vxpose.xlu0.b32.start [1/16] %v160, 128
        %228 = vxpose.xlu0.b32.cont [2/16] 0.0, 128
        %229 = vxpose.xlu0.b32.cont [3/16] 0.0, 128
        %230 = vxpose.xlu0.b32.cont [4/16] 0.0, 128
        %231 = vxpose.xlu0.b32.cont [5/16] 0.0, 128
        %232 = vxpose.xlu0.b32.cont [6/16] 0.0, 128
        %233 = vxpose.xlu0.b32.cont [7/16] 0.0, 128
        %234 = vxpose.xlu0.b32.cont [8/16] 0.0, 128
        %235 = vxpose.xlu0.b32.cont [9/16] 0.0, 128
        %236 = vxpose.xlu0.b32.cont [10/16] 0.0, 128
        %237 = vxpose.xlu0.b32.cont [11/16] 0.0, 128
        %238 = vxpose.xlu0.b32.cont [12/16] 0.0, 128
        %239 = vxpose.xlu0.b32.cont [13/16] 0.0, 128
        %240 = vxpose.xlu0.b32.cont [14/16] 0.0, 128
        %241 = vxpose.xlu0.b32.cont [15/16] 0.0, 128
        %242 = vxpose.xlu0.b32.end [16/16] 0.0, 128
        %v243 = vpop.trf.xlu0
        %v244 = vpop.trf.xlu0
        %v245 = vpop.trf.xlu0
        %v246 = vpop.trf.xlu0
        %v247 = vpop.trf.xlu0
        %v248 = vpop.trf.xlu0
        %v249 = vpop.trf.xlu0
        %v250 = vpop.trf.xlu0
        %v251 = vpop.trf.xlu0
        %v252 = vpop.trf.xlu0
        %v253 = vpop.trf.xlu0
        %v254 = vpop.trf.xlu0
        %v255 = vpop.trf.xlu0
        %v256 = vpop.trf.xlu0
        %v257 = vpop.trf.xlu0
        %v258 = vpop.trf.xlu0
        %259 = vxpose.xlu0.b32.start [1/16] %v162, 128
        %260 = vxpose.xlu0.b32.cont [2/16] 0.0, 128
        %261 = vxpose.xlu0.b32.cont [3/16] 0.0, 128
        %262 = vxpose.xlu0.b32.cont [4/16] 0.0, 128
        %263 = vxpose.xlu0.b32.cont [5/16] 0.0, 128
        %264 = vxpose.xlu0.b32.cont [6/16] 0.0, 128
        %265 = vxpose.xlu0.b32.cont [7/16] 0.0, 128
        %266 = vxpose.xlu0.b32.cont [8/16] 0.0, 128
        %267 = vxpose.xlu0.b32.cont [9/16] 0.0, 128
        %268 = vxpose.xlu0.b32.cont [10/16] 0.0, 128
        %269 = vxpose.xlu0.b32.cont [11/16] 0.0, 128
        %270 = vxpose.xlu0.b32.cont [12/16] 0.0, 128
        %271 = vxpose.xlu0.b32.cont [13/16] 0.0, 128
        %272 = vxpose.xlu0.b32.cont [14/16] 0.0, 128
        %273 = vxpose.xlu0.b32.cont [15/16] 0.0, 128
        %274 = vxpose.xlu0.b32.end [16/16] 0.0, 128
        %v275 = vpop.trf.xlu0
        %v276 = vpop.trf.xlu0
        %v277 = vpop.trf.xlu0
        %v278 = vpop.trf.xlu0
        %v279 = vpop.trf.xlu0
        %v280 = vpop.trf.xlu0
        %v281 = vpop.trf.xlu0
        %v282 = vpop.trf.xlu0
        %v283 = vpop.trf.xlu0
        %v284 = vpop.trf.xlu0
        %v285 = vpop.trf.xlu0
        %v286 = vpop.trf.xlu0
        %v287 = vpop.trf.xlu0
        %v288 = vpop.trf.xlu0
        %v289 = vpop.trf.xlu0
        %v290 = vpop.trf.xlu0
        %vm291 = vcmask 64512
        %292 = vst.msk [vmem:[#allocation2] sm:$0xff] %vm291, %v179
        %293 = vst.msk [vmem:[#allocation2 + $0x8] sm:$0xff] %vm291, %v180
        %294 = vst.msk [vmem:[#allocation2 + $0x10] sm:$0xff] %vm291, %v211
        %295 = vst.msk [vmem:[#allocation2 + $0x18] sm:$0xff] %vm291, %v212
        %296 = vst.msk [vmem:[#allocation2 + $0x20] sm:$0xff] %vm291, %v243
        %297 = vst.msk [vmem:[#allocation2 + $0x28] sm:$0xff] %vm291, %v244
        %298 = vst.msk [vmem:[#allocation2 + $0x30] sm:$0xff] %vm291, %v275
        %299 = vst.msk [vmem:[#allocation2 + $0x38] sm:$0xff] %vm291, %v276
        %s300 = scalar_lea.vmem %s135, 1 [#allocation3]
        %v301 = vld [vmem:[%s300] ss:$2 sm:$0xff]
        %s302 = scalar_lea.vmem %s135, 17 [#allocation3]
        %v303 = vld [vmem:[%s302] ss:$2 sm:$0xff]
        %s304 = scalar_lea.vmem %s135, 33 [#allocation3]
        %v305 = vld [vmem:[%s304] ss:$2 sm:$0xff]
        %s306 = scalar_lea.vmem %s135, 49 [#allocation3]
        %v307 = vld [vmem:[%s306] ss:$2 sm:$0xff]
        %308 = vxpose.xlu0.b32.start [1/16] %v301, 128
        %309 = vxpose.xlu0.b32.cont [2/16] 0.0, 128
        %310 = vxpose.xlu0.b32.cont [3/16] 0.0, 128
        %311 = vxpose.xlu0.b32.cont [4/16] 0.0, 128
        %312 = vxpose.xlu0.b32.cont [5/16] 0.0, 128
        %313 = vxpose.xlu0.b32.cont [6/16] 0.0, 128
        %314 = vxpose.xlu0.b32.cont [7/16] 0.0, 128
        %315 = vxpose.xlu0.b32.cont [8/16] 0.0, 128
        %316 = vxpose.xlu0.b32.cont [9/16] 0.0, 128
        %317 = vxpose.xlu0.b32.cont [10/16] 0.0, 128
        %318 = vxpose.xlu0.b32.cont [11/16] 0.0, 128
        %319 = vxpose.xlu0.b32.cont [12/16] 0.0, 128
        %320 = vxpose.xlu0.b32.cont [13/16] 0.0, 128
        %321 = vxpose.xlu0.b32.cont [14/16] 0.0, 128
        %322 = vxpose.xlu0.b32.cont [15/16] 0.0, 128
        %323 = vxpose.xlu0.b32.end [16/16] 0.0, 128
        %v324 = vpop.trf.xlu0
        %v325 = vpop.trf.xlu0
        %v326 = vpop.trf.xlu0
        %v327 = vpop.trf.xlu0
        %v328 = vpop.trf.xlu0
        %v329 = vpop.trf.xlu0
        %v330 = vpop.trf.xlu0
        %v331 = vpop.trf.xlu0
        %v332 = vpop.trf.xlu0
        %v333 = vpop.trf.xlu0
        %v334 = vpop.trf.xlu0
        %v335 = vpop.trf.xlu0
        %v336 = vpop.trf.xlu0
        %v337 = vpop.trf.xlu0
        %v338 = vpop.trf.xlu0
        %v339 = vpop.trf.xlu0
        %340 = vxpose.xlu0.b32.start [1/16] %v303, 128
        %341 = vxpose.xlu0.b32.cont [2/16] 0.0, 128
        %342 = vxpose.xlu0.b32.cont [3/16] 0.0, 128
        %343 = vxpose.xlu0.b32.cont [4/16] 0.0, 128
        %344 = vxpose.xlu0.b32.cont [5/16] 0.0, 128
        %345 = vxpose.xlu0.b32.cont [6/16] 0.0, 128
        %346 = vxpose.xlu0.b32.cont [7/16] 0.0, 128
        %347 = vxpose.xlu0.b32.cont [8/16] 0.0, 128
        %348 = vxpose.xlu0.b32.cont [9/16] 0.0, 128
        %349 = vxpose.xlu0.b32.cont [10/16] 0.0, 128
        %350 = vxpose.xlu0.b32.cont [11/16] 0.0, 128
        %351 = vxpose.xlu0.b32.cont [12/16] 0.0, 128
        %352 = vxpose.xlu0.b32.cont [13/16] 0.0, 128
        %353 = vxpose.xlu0.b32.cont [14/16] 0.0, 128
        %354 = vxpose.xlu0.b32.cont [15/16] 0.0, 128
        %355 = vxpose.xlu0.b32.end [16/16] 0.0, 128
        %v356 = vpop.trf.xlu0
        %v357 = vpop.trf.xlu0
        %v358 = vpop.trf.xlu0
        %v359 = vpop.trf.xlu0
        %v360 = vpop.trf.xlu0
        %v361 = vpop.trf.xlu0
        %v362 = vpop.trf.xlu0
        %v363 = vpop.trf.xlu0
        %v364 = vpop.trf.xlu0
        %v365 = vpop.trf.xlu0
        %v366 = vpop.trf.xlu0
        %v367 = vpop.trf.xlu0
        %v368 = vpop.trf.xlu0
        %v369 = vpop.trf.xlu0
        %v370 = vpop.trf.xlu0
        %v371 = vpop.trf.xlu0
        %372 = vxpose.xlu0.b32.start [1/16] %v305, 128
        %373 = vxpose.xlu0.b32.cont [2/16] 0.0, 128
        %374 = vxpose.xlu0.b32.cont [3/16] 0.0, 128
        %375 = vxpose.xlu0.b32.cont [4/16] 0.0, 128
        %376 = vxpose.xlu0.b32.cont [5/16] 0.0, 128
        %377 = vxpose.xlu0.b32.cont [6/16] 0.0, 128
        %378 = vxpose.xlu0.b32.cont [7/16] 0.0, 128
        %379 = vxpose.xlu0.b32.cont [8/16] 0.0, 128
        %380 = vxpose.xlu0.b32.cont [9/16] 0.0, 128
        %381 = vxpose.xlu0.b32.cont [10/16] 0.0, 128
        %382 = vxpose.xlu0.b32.cont [11/16] 0.0, 128
        %383 = vxpose.xlu0.b32.cont [12/16] 0.0, 128
        %384 = vxpose.xlu0.b32.cont [13/16] 0.0, 128
        %385 = vxpose.xlu0.b32.cont [14/16] 0.0, 128
        %386 = vxpose.xlu0.b32.cont [15/16] 0.0, 128
        %387 = vxpose.xlu0.b32.end [16/16] 0.0, 128
        %v388 = vpop.trf.xlu0
        %v389 = vpop.trf.xlu0
        %v390 = vpop.trf.xlu0
        %v391 = vpop.trf.xlu0
        %v392 = vpop.trf.xlu0
        %v393 = vpop.trf.xlu0
        %v394 = vpop.trf.xlu0
        %v395 = vpop.trf.xlu0
        %v396 = vpop.trf.xlu0
        %v397 = vpop.trf.xlu0
        %v398 = vpop.trf.xlu0
        %v399 = vpop.trf.xlu0
        %v400 = vpop.trf.xlu0
        %v401 = vpop.trf.xlu0
        %v402 = vpop.trf.xlu0
        %v403 = vpop.trf.xlu0
        %404 = vxpose.xlu0.b32.start [1/16] %v307, 128
        %405 = vxpose.xlu0.b32.cont [2/16] 0.0, 128
        %406 = vxpose.xlu0.b32.cont [3/16] 0.0, 128
        %407 = vxpose.xlu0.b32.cont [4/16] 0.0, 128
        %408 = vxpose.xlu0.b32.cont [5/16] 0.0, 128
        %409 = vxpose.xlu0.b32.cont [6/16] 0.0, 128
        %410 = vxpose.xlu0.b32.cont [7/16] 0.0, 128
        %411 = vxpose.xlu0.b32.cont [8/16] 0.0, 128
        %412 = vxpose.xlu0.b32.cont [9/16] 0.0, 128
        %413 = vxpose.xlu0.b32.cont [10/16] 0.0, 128
        %414 = vxpose.xlu0.b32.cont [11/16] 0.0, 128
        %415 = vxpose.xlu0.b32.cont [12/16] 0.0, 128
        %416 = vxpose.xlu0.b32.cont [13/16] 0.0, 128
        %417 = vxpose.xlu0.b32.cont [14/16] 0.0, 128
        %418 = vxpose.xlu0.b32.cont [15/16] 0.0, 128
        %419 = vxpose.xlu0.b32.end [16/16] 0.0, 128
        %v420 = vpop.trf.xlu0
        %v421 = vpop.trf.xlu0
        %v422 = vpop.trf.xlu0
        %v423 = vpop.trf.xlu0
        %v424 = vpop.trf.xlu0
        %v425 = vpop.trf.xlu0
        %v426 = vpop.trf.xlu0
        %v427 = vpop.trf.xlu0
        %v428 = vpop.trf.xlu0
        %v429 = vpop.trf.xlu0
        %v430 = vpop.trf.xlu0
        %v431 = vpop.trf.xlu0
        %v432 = vpop.trf.xlu0
        %v433 = vpop.trf.xlu0
        %v434 = vpop.trf.xlu0
        %v435 = vpop.trf.xlu0
        %s436 = scalar_lea.vmem [#allocation2], 64
        %437 = vst.msk [vmem:[%s436] sm:$0xff] %vm291, %v324
        %438 = vst.msk [vmem:[%s436 + $0x8] sm:$0xff] %vm291, %v325
        %439 = vst.msk [vmem:[%s436 + $0x10] sm:$0xff] %vm291, %v356
        %440 = vst.msk [vmem:[%s436 + $0x18] sm:$0xff] %vm291, %v357
        %441 = vst.msk [vmem:[%s436 + $0x20] sm:$0xff] %vm291, %v388
        %442 = vst.msk [vmem:[%s436 + $0x28] sm:$0xff] %vm291, %v389
        %443 = vst.msk [vmem:[%s436 + $0x30] sm:$0xff] %vm291, %v420
        %444 = vst.msk [vmem:[%s436 + $0x38] sm:$0xff] %vm291, %v421
        %v445 = vld [vmem:[#allocation2] ss:$2 sm:$0xff]
        %s446 = scalar_lea.vmem [#allocation2], 16
        %v447 = vld [vmem:[%s446] ss:$2 sm:$0xff]
        %s448 = scalar_lea.vmem [#allocation2], 32
        %v449 = vld [vmem:[%s448] ss:$2 sm:$0xff]
        %s450 = scalar_lea.vmem [#allocation2], 48
        %v451 = vld [vmem:[%s450] ss:$2 sm:$0xff]
        %452 = vxpose.xlu0.b32.start [1/16] %v445, 128
        %453 = vxpose.xlu0.b32.cont [2/16] 0.0, 128
        %454 = vxpose.xlu0.b32.cont [3/16] 0.0, 128
        %455 = vxpose.xlu0.b32.cont [4/16] 0.0, 128
        %456 = vxpose.xlu0.b32.cont [5/16] 0.0, 128
        %457 = vxpose.xlu0.b32.cont [6/16] 0.0, 128
        %458 = vxpose.xlu0.b32.cont [7/16] 0.0, 128
        %459 = vxpose.xlu0.b32.cont [8/16] 0.0, 128
        %460 = vxpose.xlu0.b32.cont [9/16] 0.0, 128
        %461 = vxpose.xlu0.b32.cont [10/16] 0.0, 128
        %462 = vxpose.xlu0.b32.cont [11/16] 0.0, 128
        %463 = vxpose.xlu0.b32.cont [12/16] 0.0, 128
        %464 = vxpose.xlu0.b32.cont [13/16] 0.0, 128
        %465 = vxpose.xlu0.b32.cont [14/16] 0.0, 128
        %466 = vxpose.xlu0.b32.cont [15/16] 0.0, 128
        %467 = vxpose.xlu0.b32.end [16/16] 0.0, 128
        %v468 = vpop.trf.xlu0
        %v469 = vpop.trf.xlu0
        %v470 = vpop.trf.xlu0
        %v471 = vpop.trf.xlu0
        %v472 = vpop.trf.xlu0
        %v473 = vpop.trf.xlu0
        %v474 = vpop.trf.xlu0
        %v475 = vpop.trf.xlu0
        %v476 = vpop.trf.xlu0
        %v477 = vpop.trf.xlu0
        %v478 = vpop.trf.xlu0
        %v479 = vpop.trf.xlu0
        %v480 = vpop.trf.xlu0
        %v481 = vpop.trf.xlu0
        %v482 = vpop.trf.xlu0
        %v483 = vpop.trf.xlu0
        %484 = vxpose.xlu0.b32.start [1/16] %v447, 128
        %485 = vxpose.xlu0.b32.cont [2/16] 0.0, 128
        %486 = vxpose.xlu0.b32.cont [3/16] 0.0, 128
        %487 = vxpose.xlu0.b32.cont [4/16] 0.0, 128
        %488 = vxpose.xlu0.b32.cont [5/16] 0.0, 128
        %489 = vxpose.xlu0.b32.cont [6/16] 0.0, 128
        %490 = vxpose.xlu0.b32.cont [7/16] 0.0, 128
        %491 = vxpose.xlu0.b32.cont [8/16] 0.0, 128
        %492 = vxpose.xlu0.b32.cont [9/16] 0.0, 128
        %493 = vxpose.xlu0.b32.cont [10/16] 0.0, 128
        %494 = vxpose.xlu0.b32.cont [11/16] 0.0, 128
        %495 = vxpose.xlu0.b32.cont [12/16] 0.0, 128
        %496 = vxpose.xlu0.b32.cont [13/16] 0.0, 128
        %497 = vxpose.xlu0.b32.cont [14/16] 0.0, 128
        %498 = vxpose.xlu0.b32.cont [15/16] 0.0, 128
        %499 = vxpose.xlu0.b32.end [16/16] 0.0, 128
        %v500 = vpop.trf.xlu0
        %v501 = vpop.trf.xlu0
        %v502 = vpop.trf.xlu0
        %v503 = vpop.trf.xlu0
        %v504 = vpop.trf.xlu0
        %v505 = vpop.trf.xlu0
        %v506 = vpop.trf.xlu0
        %v507 = vpop.trf.xlu0
        %v508 = vpop.trf.xlu0
        %v509 = vpop.trf.xlu0
        %v510 = vpop.trf.xlu0
        %v511 = vpop.trf.xlu0
        %v512 = vpop.trf.xlu0
        %v513 = vpop.trf.xlu0
        %v514 = vpop.trf.xlu0
        %v515 = vpop.trf.xlu0
        %516 = vxpose.xlu0.b32.start [1/16] %v449, 128
        %517 = vxpose.xlu0.b32.cont [2/16] 0.0, 128
        %518 = vxpose.xlu0.b32.cont [3/16] 0.0, 128
        %519 = vxpose.xlu0.b32.cont [4/16] 0.0, 128
        %520 = vxpose.xlu0.b32.cont [5/16] 0.0, 128
        %521 = vxpose.xlu0.b32.cont [6/16] 0.0, 128
        %522 = vxpose.xlu0.b32.cont [7/16] 0.0, 128
        %523 = vxpose.xlu0.b32.cont [8/16] 0.0, 128
        %524 = vxpose.xlu0.b32.cont [9/16] 0.0, 128
        %525 = vxpose.xlu0.b32.cont [10/16] 0.0, 128
        %526 = vxpose.xlu0.b32.cont [11/16] 0.0, 128
        %527 = vxpose.xlu0.b32.cont [12/16] 0.0, 128
        %528 = vxpose.xlu0.b32.cont [13/16] 0.0, 128
        %529 = vxpose.xlu0.b32.cont [14/16] 0.0, 128
        %530 = vxpose.xlu0.b32.cont [15/16] 0.0, 128
        %531 = vxpose.xlu0.b32.end [16/16] 0.0, 128
        %v532 = vpop.trf.xlu0
        %v533 = vpop.trf.xlu0
        %v534 = vpop.trf.xlu0
        %v535 = vpop.trf.xlu0
        %v536 = vpop.trf.xlu0
        %v537 = vpop.trf.xlu0
        %v538 = vpop.trf.xlu0
        %v539 = vpop.trf.xlu0
        %v540 = vpop.trf.xlu0
        %v541 = vpop.trf.xlu0
        %v542 = vpop.trf.xlu0
        %v543 = vpop.trf.xlu0
        %v544 = vpop.trf.xlu0
        %v545 = vpop.trf.xlu0
        %v546 = vpop.trf.xlu0
        %v547 = vpop.trf.xlu0
        %548 = vxpose.xlu0.b32.start [1/16] %v451, 128
        %549 = vxpose.xlu0.b32.cont [2/16] 0.0, 128
        %550 = vxpose.xlu0.b32.cont [3/16] 0.0, 128
        %551 = vxpose.xlu0.b32.cont [4/16] 0.0, 128
        %552 = vxpose.xlu0.b32.cont [5/16] 0.0, 128
        %553 = vxpose.xlu0.b32.cont [6/16] 0.0, 128
        %554 = vxpose.xlu0.b32.cont [7/16] 0.0, 128
        %555 = vxpose.xlu0.b32.cont [8/16] 0.0, 128
        %556 = vxpose.xlu0.b32.cont [9/16] 0.0, 128
        %557 = vxpose.xlu0.b32.cont [10/16] 0.0, 128
        %558 = vxpose.xlu0.b32.cont [11/16] 0.0, 128
        %559 = vxpose.xlu0.b32.cont [12/16] 0.0, 128
        %560 = vxpose.xlu0.b32.cont [13/16] 0.0, 128
        %561 = vxpose.xlu0.b32.cont [14/16] 0.0, 128
        %562 = vxpose.xlu0.b32.cont [15/16] 0.0, 128
        %563 = vxpose.xlu0.b32.end [16/16] 0.0, 128
        %v564 = vpop.trf.xlu0
        %v565 = vpop.trf.xlu0
        %v566 = vpop.trf.xlu0
        %v567 = vpop.trf.xlu0
        %v568 = vpop.trf.xlu0
        %v569 = vpop.trf.xlu0
        %v570 = vpop.trf.xlu0
        %v571 = vpop.trf.xlu0
        %v572 = vpop.trf.xlu0
        %v573 = vpop.trf.xlu0
        %v574 = vpop.trf.xlu0
        %v575 = vpop.trf.xlu0
        %v576 = vpop.trf.xlu0
        %v577 = vpop.trf.xlu0
        %v578 = vpop.trf.xlu0
        %v579 = vpop.trf.xlu0
        %580 = vst.msk [vmem:[%s153] sm:$0xff] %vm291, %v468
        %581 = vst.msk [vmem:[%s153 + $0x8] sm:$0xff] %vm291, %v500
        %582 = vst.msk [vmem:[%s153 + $0x10] sm:$0xff] %vm291, %v532
        %583 = vst.msk [vmem:[%s153 + $0x18] sm:$0xff] %vm291, %v564
        %s584 = scalar_lea.vmem [#allocation2], 1
        %v585 = vld [vmem:[%s584] ss:$2 sm:$0xff]
        %s586 = scalar_lea.vmem [#allocation2], 17
        %v587 = vld [vmem:[%s586] ss:$2 sm:$0xff]
        %s588 = scalar_lea.vmem [#allocation2], 33
        %v589 = vld [vmem:[%s588] ss:$2 sm:$0xff]
        %s590 = scalar_lea.vmem [#allocation2], 49
        %v591 = vld [vmem:[%s590] ss:$2 sm:$0xff]
        %592 = vxpose.xlu0.b32.start [1/16] %v585, 128
        %593 = vxpose.xlu0.b32.cont [2/16] 0.0, 128
        %594 = vxpose.xlu0.b32.cont [3/16] 0.0, 128
        %595 = vxpose.xlu0.b32.cont [4/16] 0.0, 128
        %596 = vxpose.xlu0.b32.cont [5/16] 0.0, 128
        %597 = vxpose.xlu0.b32.cont [6/16] 0.0, 128
        %598 = vxpose.xlu0.b32.cont [7/16] 0.0, 128
        %599 = vxpose.xlu0.b32.cont [8/16] 0.0, 128
        %600 = vxpose.xlu0.b32.cont [9/16] 0.0, 128
        %601 = vxpose.xlu0.b32.cont [10/16] 0.0, 128
        %602 = vxpose.xlu0.b32.cont [11/16] 0.0, 128
        %603 = vxpose.xlu0.b32.cont [12/16] 0.0, 128
        %604 = vxpose.xlu0.b32.cont [13/16] 0.0, 128
        %605 = vxpose.xlu0.b32.cont [14/16] 0.0, 128
        %606 = vxpose.xlu0.b32.cont [15/16] 0.0, 128
        %607 = vxpose.xlu0.b32.end [16/16] 0.0, 128
        %v608 = vpop.trf.xlu0
        %v609 = vpop.trf.xlu0
        %v610 = vpop.trf.xlu0
        %v611 = vpop.trf.xlu0
        %v612 = vpop.trf.xlu0
        %v613 = vpop.trf.xlu0
        %v614 = vpop.trf.xlu0
        %v615 = vpop.trf.xlu0
        %v616 = vpop.trf.xlu0
        %v617 = vpop.trf.xlu0
        %v618 = vpop.trf.xlu0
        %v619 = vpop.trf.xlu0
        %v620 = vpop.trf.xlu0
        %v621 = vpop.trf.xlu0
        %v622 = vpop.trf.xlu0
        %v623 = vpop.trf.xlu0
        %624 = vxpose.xlu0.b32.start [1/16] %v587, 128
        %625 = vxpose.xlu0.b32.cont [2/16] 0.0, 128
        %626 = vxpose.xlu0.b32.cont [3/16] 0.0, 128
        %627 = vxpose.xlu0.b32.cont [4/16] 0.0, 128
        %628 = vxpose.xlu0.b32.cont [5/16] 0.0, 128
        %629 = vxpose.xlu0.b32.cont [6/16] 0.0, 128
        %630 = vxpose.xlu0.b32.cont [7/16] 0.0, 128
        %631 = vxpose.xlu0.b32.cont [8/16] 0.0, 128
        %632 = vxpose.xlu0.b32.cont [9/16] 0.0, 128
        %633 = vxpose.xlu0.b32.cont [10/16] 0.0, 128
        %634 = vxpose.xlu0.b32.cont [11/16] 0.0, 128
        %635 = vxpose.xlu0.b32.cont [12/16] 0.0, 128
        %636 = vxpose.xlu0.b32.cont [13/16] 0.0, 128
        %637 = vxpose.xlu0.b32.cont [14/16] 0.0, 128
        %638 = vxpose.xlu0.b32.cont [15/16] 0.0, 128
        %639 = vxpose.xlu0.b32.end [16/16] 0.0, 128
        %v640 = vpop.trf.xlu0
        %v641 = vpop.trf.xlu0
        %v642 = vpop.trf.xlu0
        %v643 = vpop.trf.xlu0
        %v644 = vpop.trf.xlu0
        %v645 = vpop.trf.xlu0
        %v646 = vpop.trf.xlu0
        %v647 = vpop.trf.xlu0
        %v648 = vpop.trf.xlu0
        %v649 = vpop.trf.xlu0
        %v650 = vpop.trf.xlu0
        %v651 = vpop.trf.xlu0
        %v652 = vpop.trf.xlu0
        %v653 = vpop.trf.xlu0
        %v654 = vpop.trf.xlu0
        %v655 = vpop.trf.xlu0
        %656 = vxpose.xlu0.b32.start [1/16] %v589, 128
        %657 = vxpose.xlu0.b32.cont [2/16] 0.0, 128
        %658 = vxpose.xlu0.b32.cont [3/16] 0.0, 128
        %659 = vxpose.xlu0.b32.cont [4/16] 0.0, 128
        %660 = vxpose.xlu0.b32.cont [5/16] 0.0, 128
        %661 = vxpose.xlu0.b32.cont [6/16] 0.0, 128
        %662 = vxpose.xlu0.b32.cont [7/16] 0.0, 128
        %663 = vxpose.xlu0.b32.cont [8/16] 0.0, 128
        %664 = vxpose.xlu0.b32.cont [9/16] 0.0, 128
        %665 = vxpose.xlu0.b32.cont [10/16] 0.0, 128
        %666 = vxpose.xlu0.b32.cont [11/16] 0.0, 128
        %667 = vxpose.xlu0.b32.cont [12/16] 0.0, 128
        %668 = vxpose.xlu0.b32.cont [13/16] 0.0, 128
        %669 = vxpose.xlu0.b32.cont [14/16] 0.0, 128
        %670 = vxpose.xlu0.b32.cont [15/16] 0.0, 128
        %671 = vxpose.xlu0.b32.end [16/16] 0.0, 128
        %v672 = vpop.trf.xlu0
        %v673 = vpop.trf.xlu0
        %v674 = vpop.trf.xlu0
        %v675 = vpop.trf.xlu0
        %v676 = vpop.trf.xlu0
        %v677 = vpop.trf.xlu0
        %v678 = vpop.trf.xlu0
        %v679 = vpop.trf.xlu0
        %v680 = vpop.trf.xlu0
        %v681 = vpop.trf.xlu0
        %v682 = vpop.trf.xlu0
        %v683 = vpop.trf.xlu0
        %v684 = vpop.trf.xlu0
        %v685 = vpop.trf.xlu0
        %v686 = vpop.trf.xlu0
        %v687 = vpop.trf.xlu0
        %688 = vxpose.xlu0.b32.start [1/16] %v591, 128
        %689 = vxpose.xlu0.b32.cont [2/16] 0.0, 128
        %690 = vxpose.xlu0.b32.cont [3/16] 0.0, 128
        %691 = vxpose.xlu0.b32.cont [4/16] 0.0, 128
        %692 = vxpose.xlu0.b32.cont [5/16] 0.0, 128
        %693 = vxpose.xlu0.b32.cont [6/16] 0.0, 128
        %694 = vxpose.xlu0.b32.cont [7/16] 0.0, 128
        %695 = vxpose.xlu0.b32.cont [8/16] 0.0, 128
        %696 = vxpose.xlu0.b32.cont [9/16] 0.0, 128
        %697 = vxpose.xlu0.b32.cont [10/16] 0.0, 128
        %698 = vxpose.xlu0.b32.cont [11/16] 0.0, 128
        %699 = vxpose.xlu0.b32.cont [12/16] 0.0, 128
        %700 = vxpose.xlu0.b32.cont [13/16] 0.0, 128
        %701 = vxpose.xlu0.b32.cont [14/16] 0.0, 128
        %702 = vxpose.xlu0.b32.cont [15/16] 0.0, 128
        %703 = vxpose.xlu0.b32.end [16/16] 0.0, 128
        %v704 = vpop.trf.xlu0
        %v705 = vpop.trf.xlu0
        %v706 = vpop.trf.xlu0
        %v707 = vpop.trf.xlu0
        %v708 = vpop.trf.xlu0
        %v709 = vpop.trf.xlu0
        %v710 = vpop.trf.xlu0
        %v711 = vpop.trf.xlu0
        %v712 = vpop.trf.xlu0
        %v713 = vpop.trf.xlu0
        %v714 = vpop.trf.xlu0
        %v715 = vpop.trf.xlu0
        %v716 = vpop.trf.xlu0
        %v717 = vpop.trf.xlu0
        %v718 = vpop.trf.xlu0
        %v719 = vpop.trf.xlu0
        %s720 = scalar_lea.vmem %s153, 32 [#allocation6]
        %721 = vst.msk [vmem:[%s720] sm:$0xff] %vm291, %v608
        %722 = vst.msk [vmem:[%s720 + $0x8] sm:$0xff] %vm291, %v640
        %723 = vst.msk [vmem:[%s720 + $0x10] sm:$0xff] %vm291, %v672
        %724 = vst.msk [vmem:[%s720 + $0x18] sm:$0xff] %vm291, %v704
        %v725 = vld [vmem:[%s436] ss:$2 sm:$0xff]
        %s726 = scalar_lea.vmem %s436, 16 [#allocation2]
        %v727 = vld [vmem:[%s726] ss:$2 sm:$0xff]
        %s728 = scalar_lea.vmem %s436, 32 [#allocation2]
        %v729 = vld [vmem:[%s728] ss:$2 sm:$0xff]
        %s730 = scalar_lea.vmem %s436, 48 [#allocation2]
        %v731 = vld [vmem:[%s730] ss:$2 sm:$0xff]
        %732 = vxpose.xlu0.b32.start [1/16] %v725, 128
        %733 = vxpose.xlu0.b32.cont [2/16] 0.0, 128
        %734 = vxpose.xlu0.b32.cont [3/16] 0.0, 128
        %735 = vxpose.xlu0.b32.cont [4/16] 0.0, 128
        %736 = vxpose.xlu0.b32.cont [5/16] 0.0, 128
        %737 = vxpose.xlu0.b32.cont [6/16] 0.0, 128
        %738 = vxpose.xlu0.b32.cont [7/16] 0.0, 128
        %739 = vxpose.xlu0.b32.cont [8/16] 0.0, 128
        %740 = vxpose.xlu0.b32.cont [9/16] 0.0, 128
        %741 = vxpose.xlu0.b32.cont [10/16] 0.0, 128
        %742 = vxpose.xlu0.b32.cont [11/16] 0.0, 128
        %743 = vxpose.xlu0.b32.cont [12/16] 0.0, 128
        %744 = vxpose.xlu0.b32.cont [13/16] 0.0, 128
        %745 = vxpose.xlu0.b32.cont [14/16] 0.0, 128
        %746 = vxpose.xlu0.b32.cont [15/16] 0.0, 128
        %747 = vxpose.xlu0.b32.end [16/16] 0.0, 128
        %v748 = vpop.trf.xlu0
        %v749 = vpop.trf.xlu0
        %v750 = vpop.trf.xlu0
        %v751 = vpop.trf.xlu0
        %v752 = vpop.trf.xlu0
        %v753 = vpop.trf.xlu0
        %v754 = vpop.trf.xlu0
        %v755 = vpop.trf.xlu0
        %v756 = vpop.trf.xlu0
        %v757 = vpop.trf.xlu0
        %v758 = vpop.trf.xlu0
        %v759 = vpop.trf.xlu0
        %v760 = vpop.trf.xlu0
        %v761 = vpop.trf.xlu0
        %v762 = vpop.trf.xlu0
        %v763 = vpop.trf.xlu0
        %764 = vxpose.xlu0.b32.start [1/16] %v727, 128
        %765 = vxpose.xlu0.b32.cont [2/16] 0.0, 128
        %766 = vxpose.xlu0.b32.cont [3/16] 0.0, 128
        %767 = vxpose.xlu0.b32.cont [4/16] 0.0, 128
        %768 = vxpose.xlu0.b32.cont [5/16] 0.0, 128
        %769 = vxpose.xlu0.b32.cont [6/16] 0.0, 128
        %770 = vxpose.xlu0.b32.cont [7/16] 0.0, 128
        %771 = vxpose.xlu0.b32.cont [8/16] 0.0, 128
        %772 = vxpose.xlu0.b32.cont [9/16] 0.0, 128
        %773 = vxpose.xlu0.b32.cont [10/16] 0.0, 128
        %774 = vxpose.xlu0.b32.cont [11/16] 0.0, 128
        %775 = vxpose.xlu0.b32.cont [12/16] 0.0, 128
        %776 = vxpose.xlu0.b32.cont [13/16] 0.0, 128
        %777 = vxpose.xlu0.b32.cont [14/16] 0.0, 128
        %778 = vxpose.xlu0.b32.cont [15/16] 0.0, 128
        %779 = vxpose.xlu0.b32.end [16/16] 0.0, 128
        %v780 = vpop.trf.xlu0
        %v781 = vpop.trf.xlu0
        %v782 = vpop.trf.xlu0
        %v783 = vpop.trf.xlu0
        %v784 = vpop.trf.xlu0
        %v785 = vpop.trf.xlu0
        %v786 = vpop.trf.xlu0
        %v787 = vpop.trf.xlu0
        %v788 = vpop.trf.xlu0
        %v789 = vpop.trf.xlu0
        %v790 = vpop.trf.xlu0
        %v791 = vpop.trf.xlu0
        %v792 = vpop.trf.xlu0
        %v793 = vpop.trf.xlu0
        %v794 = vpop.trf.xlu0
        %v795 = vpop.trf.xlu0
        %796 = vxpose.xlu0.b32.start [1/16] %v729, 128
        %797 = vxpose.xlu0.b32.cont [2/16] 0.0, 128
        %798 = vxpose.xlu0.b32.cont [3/16] 0.0, 128
        %799 = vxpose.xlu0.b32.cont [4/16] 0.0, 128
        %800 = vxpose.xlu0.b32.cont [5/16] 0.0, 128
        %801 = vxpose.xlu0.b32.cont [6/16] 0.0, 128
        %802 = vxpose.xlu0.b32.cont [7/16] 0.0, 128
        %803 = vxpose.xlu0.b32.cont [8/16] 0.0, 128
        %804 = vxpose.xlu0.b32.cont [9/16] 0.0, 128
        %805 = vxpose.xlu0.b32.cont [10/16] 0.0, 128
        %806 = vxpose.xlu0.b32.cont [11/16] 0.0, 128
        %807 = vxpose.xlu0.b32.cont [12/16] 0.0, 128
        %808 = vxpose.xlu0.b32.cont [13/16] 0.0, 128
        %809 = vxpose.xlu0.b32.cont [14/16] 0.0, 128
        %810 = vxpose.xlu0.b32.cont [15/16] 0.0, 128
        %811 = vxpose.xlu0.b32.end [16/16] 0.0, 128
        %v812 = vpop.trf.xlu0
        %v813 = vpop.trf.xlu0
        %v814 = vpop.trf.xlu0
        %v815 = vpop.trf.xlu0
        %v816 = vpop.trf.xlu0
        %v817 = vpop.trf.xlu0
        %v818 = vpop.trf.xlu0
        %v819 = vpop.trf.xlu0
        %v820 = vpop.trf.xlu0
        %v821 = vpop.trf.xlu0
        %v822 = vpop.trf.xlu0
        %v823 = vpop.trf.xlu0
        %v824 = vpop.trf.xlu0
        %v825 = vpop.trf.xlu0
        %v826 = vpop.trf.xlu0
        %v827 = vpop.trf.xlu0
        %828 = vxpose.xlu0.b32.start [1/16] %v731, 128
        %829 = vxpose.xlu0.b32.cont [2/16] 0.0, 128
        %830 = vxpose.xlu0.b32.cont [3/16] 0.0, 128
        %831 = vxpose.xlu0.b32.cont [4/16] 0.0, 128
        %832 = vxpose.xlu0.b32.cont [5/16] 0.0, 128
        %833 = vxpose.xlu0.b32.cont [6/16] 0.0, 128
        %834 = vxpose.xlu0.b32.cont [7/16] 0.0, 128
        %835 = vxpose.xlu0.b32.cont [8/16] 0.0, 128
        %836 = vxpose.xlu0.b32.cont [9/16] 0.0, 128
        %837 = vxpose.xlu0.b32.cont [10/16] 0.0, 128
        %838 = vxpose.xlu0.b32.cont [11/16] 0.0, 128
        %839 = vxpose.xlu0.b32.cont [12/16] 0.0, 128
        %840 = vxpose.xlu0.b32.cont [13/16] 0.0, 128
        %841 = vxpose.xlu0.b32.cont [14/16] 0.0, 128
        %842 = vxpose.xlu0.b32.cont [15/16] 0.0, 128
        %843 = vxpose.xlu0.b32.end [16/16] 0.0, 128
        %v844 = vpop.trf.xlu0
        %v845 = vpop.trf.xlu0
        %v846 = vpop.trf.xlu0
        %v847 = vpop.trf.xlu0
        %v848 = vpop.trf.xlu0
        %v849 = vpop.trf.xlu0
        %v850 = vpop.trf.xlu0
        %v851 = vpop.trf.xlu0
        %v852 = vpop.trf.xlu0
        %v853 = vpop.trf.xlu0
        %v854 = vpop.trf.xlu0
        %v855 = vpop.trf.xlu0
        %v856 = vpop.trf.xlu0
        %v857 = vpop.trf.xlu0
        %v858 = vpop.trf.xlu0
        %v859 = vpop.trf.xlu0
        %s860 = scalar_lea.vmem %s153, 64 [#allocation6]
        %861 = vst.msk [vmem:[%s860] sm:$0xff] %vm291, %v748
        %862 = vst.msk [vmem:[%s860 + $0x8] sm:$0xff] %vm291, %v780
        %863 = vst.msk [vmem:[%s860 + $0x10] sm:$0xff] %vm291, %v812
        %864 = vst.msk [vmem:[%s860 + $0x18] sm:$0xff] %vm291, %v844
        %s865 = scalar_lea.vmem %s436, 1 [#allocation2]
        %v866 = vld [vmem:[%s865] ss:$2 sm:$0xff]
        %s867 = scalar_lea.vmem %s436, 17 [#allocation2]
        %v868 = vld [vmem:[%s867] ss:$2 sm:$0xff]
        %s869 = scalar_lea.vmem %s436, 33 [#allocation2]
        %v870 = vld [vmem:[%s869] ss:$2 sm:$0xff]
        %s871 = scalar_lea.vmem %s436, 49 [#allocation2]
        %v872 = vld [vmem:[%s871] ss:$2 sm:$0xff]
        %873 = vxpose.xlu0.b32.start [1/16] %v866, 128
        %874 = vxpose.xlu0.b32.cont [2/16] 0.0, 128
        %875 = vxpose.xlu0.b32.cont [3/16] 0.0, 128
        %876 = vxpose.xlu0.b32.cont [4/16] 0.0, 128
        %877 = vxpose.xlu0.b32.cont [5/16] 0.0, 128
        %878 = vxpose.xlu0.b32.cont [6/16] 0.0, 128
        %879 = vxpose.xlu0.b32.cont [7/16] 0.0, 128
        %880 = vxpose.xlu0.b32.cont [8/16] 0.0, 128
        %881 = vxpose.xlu0.b32.cont [9/16] 0.0, 128
        %882 = vxpose.xlu0.b32.cont [10/16] 0.0, 128
        %883 = vxpose.xlu0.b32.cont [11/16] 0.0, 128
        %884 = vxpose.xlu0.b32.cont [12/16] 0.0, 128
        %885 = vxpose.xlu0.b32.cont [13/16] 0.0, 128
        %886 = vxpose.xlu0.b32.cont [14/16] 0.0, 128
        %887 = vxpose.xlu0.b32.cont [15/16] 0.0, 128
        %888 = vxpose.xlu0.b32.end [16/16] 0.0, 128
        %v889 = vpop.trf.xlu0
        %v890 = vpop.trf.xlu0
        %v891 = vpop.trf.xlu0
        %v892 = vpop.trf.xlu0
        %v893 = vpop.trf.xlu0
        %v894 = vpop.trf.xlu0
        %v895 = vpop.trf.xlu0
        %v896 = vpop.trf.xlu0
        %v897 = vpop.trf.xlu0
        %v898 = vpop.trf.xlu0
        %v899 = vpop.trf.xlu0
        %v900 = vpop.trf.xlu0
        %v901 = vpop.trf.xlu0
        %v902 = vpop.trf.xlu0
        %v903 = vpop.trf.xlu0
        %v904 = vpop.trf.xlu0
        %905 = vxpose.xlu0.b32.start [1/16] %v868, 128
        %906 = vxpose.xlu0.b32.cont [2/16] 0.0, 128
        %907 = vxpose.xlu0.b32.cont [3/16] 0.0, 128
        %908 = vxpose.xlu0.b32.cont [4/16] 0.0, 128
        %909 = vxpose.xlu0.b32.cont [5/16] 0.0, 128
        %910 = vxpose.xlu0.b32.cont [6/16] 0.0, 128
        %911 = vxpose.xlu0.b32.cont [7/16] 0.0, 128
        %912 = vxpose.xlu0.b32.cont [8/16] 0.0, 128
        %913 = vxpose.xlu0.b32.cont [9/16] 0.0, 128
        %914 = vxpose.xlu0.b32.cont [10/16] 0.0, 128
        %915 = vxpose.xlu0.b32.cont [11/16] 0.0, 128
        %916 = vxpose.xlu0.b32.cont [12/16] 0.0, 128
        %917 = vxpose.xlu0.b32.cont [13/16] 0.0, 128
        %918 = vxpose.xlu0.b32.cont [14/16] 0.0, 128
        %919 = vxpose.xlu0.b32.cont [15/16] 0.0, 128
        %920 = vxpose.xlu0.b32.end [16/16] 0.0, 128
        %v921 = vpop.trf.xlu0
        %v922 = vpop.trf.xlu0
        %v923 = vpop.trf.xlu0
        %v924 = vpop.trf.xlu0
        %v925 = vpop.trf.xlu0
        %v926 = vpop.trf.xlu0
        %v927 = vpop.trf.xlu0
        %v928 = vpop.trf.xlu0
        %v929 = vpop.trf.xlu0
        %v930 = vpop.trf.xlu0
        %v931 = vpop.trf.xlu0
        %v932 = vpop.trf.xlu0
        %v933 = vpop.trf.xlu0
        %v934 = vpop.trf.xlu0
        %v935 = vpop.trf.xlu0
        %v936 = vpop.trf.xlu0
        %937 = vxpose.xlu0.b32.start [1/16] %v870, 128
        %938 = vxpose.xlu0.b32.cont [2/16] 0.0, 128
        %939 = vxpose.xlu0.b32.cont [3/16] 0.0, 128
        %940 = vxpose.xlu0.b32.cont [4/16] 0.0, 128
        %941 = vxpose.xlu0.b32.cont [5/16] 0.0, 128
        %942 = vxpose.xlu0.b32.cont [6/16] 0.0, 128
        %943 = vxpose.xlu0.b32.cont [7/16] 0.0, 128
        %944 = vxpose.xlu0.b32.cont [8/16] 0.0, 128
        %945 = vxpose.xlu0.b32.cont [9/16] 0.0, 128
        %946 = vxpose.xlu0.b32.cont [10/16] 0.0, 128
        %947 = vxpose.xlu0.b32.cont [11/16] 0.0, 128
        %948 = vxpose.xlu0.b32.cont [12/16] 0.0, 128
        %949 = vxpose.xlu0.b32.cont [13/16] 0.0, 128
        %950 = vxpose.xlu0.b32.cont [14/16] 0.0, 128
        %951 = vxpose.xlu0.b32.cont [15/16] 0.0, 128
        %952 = vxpose.xlu0.b32.end [16/16] 0.0, 128
        %v953 = vpop.trf.xlu0
        %v954 = vpop.trf.xlu0
        %v955 = vpop.trf.xlu0
        %v956 = vpop.trf.xlu0
        %v957 = vpop.trf.xlu0
        %v958 = vpop.trf.xlu0
        %v959 = vpop.trf.xlu0
        %v960 = vpop.trf.xlu0
        %v961 = vpop.trf.xlu0
        %v962 = vpop.trf.xlu0
        %v963 = vpop.trf.xlu0
        %v964 = vpop.trf.xlu0
        %v965 = vpop.trf.xlu0
        %v966 = vpop.trf.xlu0
        %v967 = vpop.trf.xlu0
        %v968 = vpop.trf.xlu0
        %969 = vxpose.xlu0.b32.start [1/16] %v872, 128
        %970 = vxpose.xlu0.b32.cont [2/16] 0.0, 128
        %971 = vxpose.xlu0.b32.cont [3/16] 0.0, 128
        %972 = vxpose.xlu0.b32.cont [4/16] 0.0, 128
        %973 = vxpose.xlu0.b32.cont [5/16] 0.0, 128
        %974 = vxpose.xlu0.b32.cont [6/16] 0.0, 128
        %975 = vxpose.xlu0.b32.cont [7/16] 0.0, 128
        %976 = vxpose.xlu0.b32.cont [8/16] 0.0, 128
        %977 = vxpose.xlu0.b32.cont [9/16] 0.0, 128
        %978 = vxpose.xlu0.b32.cont [10/16] 0.0, 128
        %979 = vxpose.xlu0.b32.cont [11/16] 0.0, 128
        %980 = vxpose.xlu0.b32.cont [12/16] 0.0, 128
        %981 = vxpose.xlu0.b32.cont [13/16] 0.0, 128
        %982 = vxpose.xlu0.b32.cont [14/16] 0.0, 128
        %983 = vxpose.xlu0.b32.cont [15/16] 0.0, 128
        %984 = vxpose.xlu0.b32.end [16/16] 0.0, 128
        %v985 = vpop.trf.xlu0
        %v986 = vpop.trf.xlu0
        %v987 = vpop.trf.xlu0
        %v988 = vpop.trf.xlu0
        %v989 = vpop.trf.xlu0
        %v990 = vpop.trf.xlu0
        %v991 = vpop.trf.xlu0
        %v992 = vpop.trf.xlu0
        %v993 = vpop.trf.xlu0
        %v994 = vpop.trf.xlu0
        %v995 = vpop.trf.xlu0
        %v996 = vpop.trf.xlu0
        %v997 = vpop.trf.xlu0
        %v998 = vpop.trf.xlu0
        %v999 = vpop.trf.xlu0
        %v1000 = vpop.trf.xlu0
        %s1001 = scalar_lea.vmem %s153, 96 [#allocation6]
        %1002 = vst.msk [vmem:[%s1001] sm:$0xff] %vm291, %v889
        %1003 = vst.msk [vmem:[%s1001 + $0x8] sm:$0xff] %vm291, %v921
        %1004 = vst.msk [vmem:[%s1001 + $0x10] sm:$0xff] %vm291, %v953
        %1005 = vst.msk [vmem:[%s1001 + $0x18] sm:$0xff] %vm291, %v985
        %s1006 = sand.u32 %s68, 1
        %s1007 = scalar_lea.sflag [#allocation5], %s1006
        %s1008 = sand.u32 %s68, 1
        %s1009 = smul.addr %s1008, 128
        %s1010 = scalar_lea.vmem [#allocation6], %s1009
        // Predicated region
        $region29: #{tpu_custom_call.1} parent=23 // pred_check
          %p1011 = pneg %p78
        $region30: #{tpu_custom_call.1} parent=23 // pred_check_branch
          %1013 = sbr.rel (%p1011) target = $region32
        $region31: #{tpu_custom_call.1} parent=23 // pred_region
          %s1014 = smul.u32 4, %s23
          %s1016 = ssub.s32 2048, 2048
          %1017 = vsyncadd %s1007, %s1016
          %s1018 = smul.addr %s22, 16
          %s1019 = sadd.s32 %s1014, %s1018
          %s1020 = smul.addr %s1019, 128
          %s1021 = scalar_lea.hbm %s1, %s1020
          %s1022 = sshll.u32 %s1010, 4
          %s1023 = int_to_ptr.vmem [resolvable:$true] %s1022
          %1028 = dma.vmem_to_hbm [thread:$0]  %s1023, 2048, %s1021, %s1007, 128, 128, 8
        $region32: #{tpu_custom_call.1} parent=23 // pred_fallthru
          _
      $region24: #{tpu_custom_call.1} parent=5 // pred_fallthru
        _
      %p1029 = scmp.le.s32.totalorder 2, %s13
      // Predicated region
      $region33: #{tpu_custom_call.1} parent=5 // pred_check
        %p1030 = pneg %p1029
      $region34: #{tpu_custom_call.1} parent=5 // pred_check_branch
        %1032 = sbr.rel (%p1030) target = $region36
      $region35: #{tpu_custom_call.1} parent=5 // pred_region
        %s1033 = ssub.s32 %s13, 2
        // Predicated region
        $region37: #{tpu_custom_call.1} parent=35 // pred_check
          %p1034 = pneg %p84
        $region38: #{tpu_custom_call.1} parent=35 // pred_check_branch
          %1036 = sbr.rel (%p1034) target = $region40
        $region39: #{tpu_custom_call.1} parent=35 // pred_region
          %s1037 = sand.u32 %s69, 1
          %s1038 = scalar_lea.sflag [#allocation5], %s1037
          %s1039 = sand.u32 %s69, 1
          %s1040 = smul.addr %s1039, 128
          %s1041 = scalar_lea.vmem [#allocation6], %s1040
          %1042 = dma.done %s1038, 2048
        $region40: #{tpu_custom_call.1} parent=35 // pred_fallthru
          _
      $region36: #{tpu_custom_call.1} parent=5 // pred_fallthru
        _
    $region6: #{tpu_custom_call.1} parent=1 // loop_footer
      %s17 = sadd.s32 1, %s13
    $region7: #{tpu_custom_call.1} parent=1 // loop_footer_branch
      %12 = sbr.rel target = $region3
    $region8: #{tpu_custom_call.1} parent=1 // loop_exit
      _
    %1043 = vsyncpa [#allocation4], 1
    %s1044 = scalar_lea.sflag [#allocation4], 1
    %1045 = vsyncpa %s1044, 1
    %1046 = vsyncpa [#allocation5], 1
    %s1047 = scalar_lea.sflag [#allocation5], 1
    %1048 = vsyncpa %s1047, 1

</llo_original>
